<compile_context>
chip_gen: v7x
topology: tpu7x:2x2x1
jax: 0.10.0
libtpu: 0.0.40
codegen_flags: <defaults>
</compile_context>

<pallas_src>
import functools

import jax
import jax.numpy as jnp
from jax.experimental import pallas as pl
from jax.experimental.pallas import tpu as pltpu


def _sub_kernel(x_ref, y_ref, o_ref, *, alpha):
    # output = input - alpha * other   (alpha is a compile-time Python scalar)
    x = x_ref[...]
    y = y_ref[...]
    if alpha == 1:
        o_ref[...] = x - y
    else:
        o_ref[...] = x - jnp.asarray(alpha, x.dtype) * y


def _sublane_multiple(dtype) -> int:
    # f32 -> 8, bf16/f16 -> 16, int8/fp8 -> 32 (packed-row sublane multiples)
    return max(8, 32 // jnp.dtype(dtype).itemsize)


_TARGET_BLOCK_BYTES = 2 << 20       # ~2 MiB per input per grid step
_SPLIT_THRESHOLD_BYTES = 512 << 10  # split single-block cases above this (v7x 2 TCs)


def deephi_sub(x, other, alpha=1, *, target_block_bytes=_TARGET_BLOCK_BYTES):
    """Elementwise x - alpha * other via a Pallas TPU kernel."""
    # `alpha` must be a static Python scalar (matches the PyTorch module, where
    # alpha is a plain keyword argument).  float() raises a clear error on
    # traced values instead of silently baking the wrong branch.
    if not isinstance(alpha, (int, float)):
        alpha = float(alpha)

    if other.shape != x.shape:
        # Rare broadcast path: plain-JAX glue.
        other = jnp.broadcast_to(other, x.shape)

    out_dtype = jnp.result_type(x.dtype, other.dtype)
    x = x.astype(out_dtype)
    other = other.astype(out_dtype)

    orig_shape = x.shape
    n = x.size
    itemsize = jnp.dtype(out_dtype).itemsize
    sub = _sublane_multiple(out_dtype)

    kernel = functools.partial(_sub_kernel, alpha=alpha)
    cparams = pltpu.CompilerParams(
        dimension_semantics=("parallel",),
        vmem_limit_bytes=32 * 1024 * 1024,
    )

    # Pick the widest lane-dense last dim that divides n -> zero-copy reshape.
    lanes = None
    for w in (4096, 2048, 1024, 512, 256, 128):
        if n % w == 0:
            lanes = w
            break

    if lanes is None:
        # Ragged element count: 1-D kernel, 128-multiple block, masked partial
        # last block.  No pad copy is materialized.
        xf = x.reshape(-1)
        yf = other.reshape(-1)
        tile = max(128, (target_block_bytes // itemsize) // 128 * 128)
        if tile >= n:
            tile = n            # full-extent block (legal for any n)
            grid = (1,)
        else:
            grid = (pl.cdiv(n, tile),)
        out = pl.pallas_call(
            kernel,
            out_shape=jax.ShapeDtypeStruct((n,), out_dtype),
            grid=grid,
            in_specs=[
                pl.BlockSpec((tile,), lambda i: (i,)),
                pl.BlockSpec((tile,), lambda i: (i,)),
            ],
            out_specs=pl.BlockSpec((tile,), lambda i: (i,)),
            compiler_params=cparams,
        )(xf, yf)
        return out.reshape(orig_shape)

    rows = n // lanes
    x2 = x.reshape(rows, lanes)
    y2 = other.reshape(rows, lanes)

    # --- block-size selection -------------------------------------------------
    tile_rows = max(sub, (target_block_bytes // (lanes * itemsize)) // sub * sub)
    if tile_rows >= rows:
        block_bytes = rows * lanes * itemsize
        if block_bytes >= _SPLIT_THRESHOLD_BYTES and rows >= 2 * sub:
            # Split so a 2-TensorCore chip (v7x) can shard the parallel axis.
            half = -(-rows // 2)
            tile_rows = -(-half // sub) * sub
        else:
            # Full-extent block (legal even if rows is not a sublane multiple).
            tile_rows = rows

    grid = (pl.cdiv(rows, tile_rows),)

    out2 = pl.pallas_call(
        kernel,
        out_shape=jax.ShapeDtypeStruct((rows, lanes), out_dtype),
        grid=grid,
        in_specs=[
            pl.BlockSpec((tile_rows, lanes), lambda i: (i, 0)),
            pl.BlockSpec((tile_rows, lanes), lambda i: (i, 0)),
        ],
        out_specs=pl.BlockSpec((tile_rows, lanes), lambda i: (i, 0)),
        compiler_params=cparams,
    )(x2, y2)

    return out2.reshape(orig_shape)


if __name__ == "__main__":
    key = jax.random.PRNGKey(0)
    k1, k2, k3, k4 = jax.random.split(key, 4)

    # NCHW activation-style tensors (divisible / lane-dense 2D path).
    x = jax.random.normal(k1, (2, 4, 16, 16), dtype=jnp.float32)
    other = jax.random.normal(k2, (2, 4, 16, 16), dtype=jnp.float32)

    # alpha = 1 (default torch.sub behavior)
    out = jax.block_until_ready(deephi_sub(x, other, alpha=1))
    ref = x - other
    assert out.shape == ref.shape and out.dtype == ref.dtype
    assert jnp.allclose(out, ref, atol=1e-6, rtol=1e-6)

    # alpha != 1 (scaled subtrahend)
    out_s = jax.block_until_ready(deephi_sub(x, other, alpha=0.5))
    ref_s = x - 0.5 * other
    assert jnp.allclose(out_s, ref_s, atol=1e-6, rtol=1e-6)

    # Ragged element count (not divisible by 128): exercises the 1-D fallback.
    xr = jax.random.normal(k3, (3, 5, 7), dtype=jnp.float32)
    yr = jax.random.normal(k4, (3, 5, 7), dtype=jnp.float32)
    out_r = jax.block_until_ready(deephi_sub(xr, yr, alpha=2.0))
    ref_r = xr - 2.0 * yr
    assert out_r.shape == ref_r.shape
    assert jnp.allclose(out_r, ref_r, atol=1e-6, rtol=1e-6)

    print("KERNEL_OK")
</pallas_src>

<mosaic_0001>
module attributes {stable_mosaic.version = 11 : i64} {
  func.func @_sub_kernel(%arg0: i32, %arg1: memref<1x2048xf32, #tpu.memory_space<vmem>>, %arg2: memref<1x2048xf32, #tpu.memory_space<vmem>>, %arg3: memref<1x2048xf32, #tpu.memory_space<vmem>>) attributes {dimension_semantics = [#tpu.dimension_semantics<parallel>], iteration_bounds = array<i64: 1>, scalar_prefetch = 0 : i64, scratch_operands = 0 : i64, tpu.core_type = #tpu.core_type<tc>, window_params = [{transform_indices = @transform_0, window_bounds = array<i64: 1, 2048>}, {transform_indices = @transform_1, window_bounds = array<i64: 1, 2048>}, {transform_indices = @transform_2, window_bounds = array<i64: 1, 2048>}]} {
    %c0 = arith.constant 0 : index
    %c0_0 = arith.constant 0 : index
    %0 = vector.load %arg1[%c0, %c0_0] : memref<1x2048xf32, #tpu.memory_space<vmem>>, vector<1x2048xf32>
    %c0_1 = arith.constant 0 : index
    %c0_2 = arith.constant 0 : index
    %1 = vector.load %arg2[%c0_1, %c0_2] : memref<1x2048xf32, #tpu.memory_space<vmem>>, vector<1x2048xf32>
    %2 = arith.subf %0, %1 : vector<1x2048xf32>
    %c0_3 = arith.constant 0 : index
    %c0_4 = arith.constant 0 : index
    %3 = vector.load %arg3[%c0_3, %c0_4] : memref<1x2048xf32, #tpu.memory_space<vmem>>, vector<1x2048xf32>
    tpu.vector_store %arg3[%c0_3, %c0_4], %2 {strides = array<i32>} : memref<1x2048xf32, #tpu.memory_space<vmem>>, vector<1x2048xf32>,
    return
  }
  func.func @transform_0(%arg0: i32) -> (i32, i32) {
    %c0_i32 = arith.constant 0 : i32
    %c0_i32_0 = arith.constant 0 : i32
    return %arg0, %c0_i32 : i32, i32
  }
  func.func @transform_1(%arg0: i32) -> (i32, i32) {
    %c0_i32 = arith.constant 0 : i32
    %c0_i32_0 = arith.constant 0 : i32
    return %arg0, %c0_i32 : i32, i32
  }
  func.func @transform_2(%arg0: i32) -> (i32, i32) {
    %c0_i32 = arith.constant 0 : i32
    %c0_i32_0 = arith.constant 0 : i32
    return %arg0, %c0_i32 : i32, i32
  }
}

</mosaic_0001>

<llo_original>
// kernel: tpu_custom_call.1
$region0: #{tpu_custom_call.1}
  #allocation0 [shape = 'u32[]', space=smem, size = 0x4, offset = 0x4, fixed_abs, tag = 'smem constant byte address 0x4 - core index']
  #allocation1 [shape = 'u32[144,128]{1,0:T(1,128)}', space=vmem, size = 0x12000, scoped, tag = 'internal scratch']
  %s0 = inlined_call_operand.hbm [shape: f32[1,2048], index: 0, kind: input, shape index: {}]
  %s1 = inlined_call_operand.hbm [shape: f32[1,2048], index: 1, kind: input, shape index: {}]
  %s2 = inlined_call_operand.hbm [shape: f32[1,2048], index: 2, kind: output, shape index: {}]
  %s3 = sld [smem:[#allocation0]]
  $region26: #{tpu_custom_call.1} parent=0
    _
  %s5 = ssub.s32 1, %s3
  %s6 = scalar_select 0, %s5, %s3
  $region1: #{tpu_custom_call.1} parent=0
    #allocation2 [shape = 'u8[8192]{0}', space=vmem, size = 0x2000, scoped, tag = 'input window, operand 0, single buffered']
    #allocation3 [shape = 's32[1]{0}', space=sflag, size = 0x4, scoped, tag = 'scoped memory for tpu_custom_call.1']
    #allocation4 [shape = 's32[1]{0}', space=sflag, size = 0x4, scoped, tag = 'scoped memory for tpu_custom_call.1']
    #allocation5 [shape = 'u8[8192]{0}', space=vmem, size = 0x2000, scoped, tag = 'input window, operand 1, single buffered']
    #allocation6 [shape = 's32[1]{0}', space=sflag, size = 0x4, scoped, tag = 'scoped memory for tpu_custom_call.1']
    #allocation7 [shape = 'u8[8192]{0}', space=vmem, size = 0x2000, scoped, tag = 'output window, operand 0, single buffered']
    %7 = vsyncpa [#allocation3], 0
    %8 = vsyncpa [#allocation6], 0
    %9 = vsyncpa [#allocation4], 0
    // Predicated region
    $region2: #{tpu_custom_call.1} parent=1 // pred_check
      _
    $region3: #{tpu_custom_call.1} parent=1 // pred_check_branch
      %11 = sbr.rel (0) target = $region5
    $region4: #{tpu_custom_call.1} parent=1 // pred_region
      %s13 = ssub.s32 256, 256
      %14 = vsyncadd [#allocation3], %s13
      %s16 = sshll.u32 [#allocation2], 4
      %s17 = int_to_ptr.vmem [resolvable:$true] %s16
      %19 = dma.hbm_to_vmem [thread:$0]  %s0, 256, %s17, [#allocation3]
    $region5: #{tpu_custom_call.1} parent=1 // pred_fallthru
      _
    // Predicated region
    $region6: #{tpu_custom_call.1} parent=1 // pred_check
      _
    $region7: #{tpu_custom_call.1} parent=1 // pred_check_branch
      %21 = sbr.rel (0) target = $region9
    $region8: #{tpu_custom_call.1} parent=1 // pred_region
      %s23 = ssub.s32 256, 256
      %24 = vsyncadd [#allocation6], %s23
      %s26 = sshll.u32 [#allocation5], 4
      %s27 = int_to_ptr.vmem [resolvable:$true] %s26
      %29 = dma.hbm_to_vmem [thread:$0]  %s1, 256, %s27, [#allocation6]
    $region9: #{tpu_custom_call.1} parent=1 // pred_fallthru
      _
    // Predicated region
    $region10: #{tpu_custom_call.1} parent=1 // pred_check
      _
    $region11: #{tpu_custom_call.1} parent=1 // pred_check_branch
      %31 = sbr.rel (0) target = $region13
    $region12: #{tpu_custom_call.1} parent=1 // pred_region
      %32 = dma.done [#allocation3], 256
    $region13: #{tpu_custom_call.1} parent=1 // pred_fallthru
      _
    // Predicated region
    $region14: #{tpu_custom_call.1} parent=1 // pred_check
      _
    $region15: #{tpu_custom_call.1} parent=1 // pred_check_branch
      %34 = sbr.rel (0) target = $region17
    $region16: #{tpu_custom_call.1} parent=1 // pred_region
      %35 = dma.done [#allocation6], 256
    $region17: #{tpu_custom_call.1} parent=1 // pred_fallthru
      _
    %v36 = vld [vmem:[#allocation2] sm:$0xff]
    %v37 = vld [vmem:[#allocation2 + $0x8] sm:$0xff]
    %v38 = vld [vmem:[#allocation5] sm:$0xff]
    %v39 = vld [vmem:[#allocation5 + $0x8] sm:$0xff]
    %v40 = vsub.f32 %v36, %v38
    %v41 = vsub.f32 %v37, %v39
    %42 = vst [vmem:[#allocation7] sm:$0xff] %v40
    %43 = vst [vmem:[#allocation7 + $0x8] sm:$0xff] %v41
    // Predicated region
    $region18: #{tpu_custom_call.1} parent=1 // pred_check
      _
    $region19: #{tpu_custom_call.1} parent=1 // pred_check_branch
      %45 = sbr.rel (0) target = $region21
    $region20: #{tpu_custom_call.1} parent=1 // pred_region
      %s47 = ssub.s32 256, 256
      %48 = vsyncadd [#allocation4], %s47
      %s50 = sshll.u32 [#allocation7], 4
      %s51 = int_to_ptr.vmem [resolvable:$true] %s50
      %53 = dma.vmem_to_hbm [thread:$0]  %s51, 256, %s2, [#allocation4]
    $region21: #{tpu_custom_call.1} parent=1 // pred_fallthru
      _
    // Predicated region
    $region22: #{tpu_custom_call.1} parent=1 // pred_check
      _
    $region23: #{tpu_custom_call.1} parent=1 // pred_check_branch
      %55 = sbr.rel (0) target = $region25
    $region24: #{tpu_custom_call.1} parent=1 // pred_region
      %56 = dma.done [#allocation4], 256
    $region25: #{tpu_custom_call.1} parent=1 // pred_fallthru
      _
    %57 = vsyncpa [#allocation3], 1
    %58 = vsyncpa [#allocation6], 1
    %59 = vsyncpa [#allocation4], 1

</llo_original>
